<compile_context>
chip_gen: v5e
topology: v5e:2x2
jax: 0.10.0
libtpu: 0.0.40
codegen_flags: <defaults>
</compile_context>

<pallas_src>
import jax
import jax.numpy as jnp
from jax.experimental import pallas as pl
from jax.experimental.pallas import tpu as pltpu


def _round_up(n, m):
    return ((n + m - 1) // m) * m


def _critic_kernel_vec(x_ref, w1_ref, b1_ref, w2_ref, b2_ref, o_ref):
    """Fused critic forward, output_size == 1.

    Layer 1 on the MXU (f32 accumulate); layer 2 (N=1) as a VPU multiply +
    lane reduction so we don't pay an MXU push/pop for one output column.
    """
    h = jnp.dot(x_ref[...].astype(w1_ref.dtype), w1_ref[...],
                preferred_element_type=jnp.float32)
    h = jnp.maximum(h + b1_ref[...].astype(jnp.float32), 0.0)       # (TB, hidden)
    w2_row = w2_ref[...].astype(jnp.float32)                        # (1, hidden)
    out = jnp.sum(h * w2_row, axis=-1, keepdims=True)               # (TB, 1)
    out = out + b2_ref[...].astype(jnp.float32)
    o_ref[...] = out.astype(o_ref.dtype)


def _critic_kernel_mat(x_ref, w1_ref, b1_ref, w2_ref, b2_ref, o_ref):
    """Fused critic forward, general output_size (both layers on MXU)."""
    h = jnp.dot(x_ref[...].astype(w1_ref.dtype), w1_ref[...],
                preferred_element_type=jnp.float32)
    h = jnp.maximum(h + b1_ref[...].astype(jnp.float32), 0.0)
    out = jnp.dot(h.astype(w2_ref.dtype), w2_ref[...],
                  preferred_element_type=jnp.float32)
    out = out + b2_ref[...].astype(jnp.float32)
    o_ref[...] = out.astype(o_ref.dtype)


def critic_forward(x, w1, b1, w2, b2, *, block_b=512):
    """x: (B, input_size); w1: (input_size, hidden); b1: (1, hidden);
    w2: (hidden, output_size); b2: (1, output_size). Returns (B, output_size)."""
    B, in_size = x.shape
    hidden = w1.shape[1]
    out_size = w2.shape[1]

    # Batch tile: multiple of 8 sublanes, capped at block_b; pad the ragged tail.
    tb = min(block_b, _round_up(B, 8))
    b_pad = _round_up(B, tb)
    if b_pad != B:
        x = jnp.pad(x, ((0, b_pad - B), (0, 0)))
    grid = (b_pad // tb,)

    use_vec = out_size == 1
    kernel = _critic_kernel_vec if use_vec else _critic_kernel_mat
    w2_arg = w2.reshape(1, hidden) if use_vec else w2
    w2_shape = (1, hidden) if use_vec else (hidden, out_size)

    dbytes = jnp.dtype(x.dtype).itemsize
    cost = pl.CostEstimate(
        flops=2 * B * (in_size * hidden + hidden * out_size),
        transcendentals=0,
        bytes_accessed=dbytes * (B * in_size + in_size * hidden + hidden
                                 + hidden * out_size + out_size + B * out_size),
    )

    # Weights/biases: constant block index -> stay VMEM-resident across the grid.
    resident = lambda shape: pl.BlockSpec(shape, lambda i: (0, 0))

    out = pl.pallas_call(
        kernel,
        out_shape=jax.ShapeDtypeStruct((b_pad, out_size), x.dtype),
        grid=grid,
        in_specs=[
            pl.BlockSpec((tb, in_size), lambda i: (i, 0)),  # x: batch-tiled, double-buffered
            resident((in_size, hidden)),                     # w1
            resident((1, hidden)),                           # b1
            resident(w2_shape),                              # w2 (row for N=1 path)
            resident((1, out_size)),                         # b2
        ],
        out_specs=pl.BlockSpec((tb, out_size), lambda i: (i, 0)),
        compiler_params=pltpu.CompilerParams(
            dimension_semantics=("parallel",)),
        cost_estimate=cost,
    )(x, w1, b1, w2_arg, b2)
    return out[:B]


def init_params(key, input_size, hidden_size, output_size, dtype=jnp.float32):
    """Deterministic synthetic parameters matching nn.Linear shapes
    (stored pre-transposed for the kernel)."""
    k1, k2, k3, k4 = jax.random.split(key, 4)
    # PyTorch nn.Linear default init scale ~ U(-1/sqrt(fan_in), 1/sqrt(fan_in))
    s1 = 1.0 / jnp.sqrt(input_size)
    s2 = 1.0 / jnp.sqrt(hidden_size)
    w1 = jax.random.uniform(k1, (input_size, hidden_size), dtype, -s1, s1)
    b1 = jax.random.uniform(k2, (1, hidden_size), dtype, -s1, s1)
    w2 = jax.random.uniform(k3, (hidden_size, output_size), dtype, -s2, s2)
    b2 = jax.random.uniform(k4, (1, output_size), dtype, -s2, s2)
    return w1, b1, w2, b2


if __name__ == "__main__":
    # Small shapes consistent with a CartPole critic: state dim 4, hidden 32, value output 1.
    batch, input_size, hidden_size, output_size = 8, 4, 32, 1

    key = jax.random.PRNGKey(0)
    kx, kp = jax.random.split(key)
    x = jax.random.normal(kx, (batch, input_size), jnp.float32)
    w1, b1, w2, b2 = init_params(kp, input_size, hidden_size, output_size)

    out = jax.block_until_ready(critic_forward(x, w1, b1, w2, b2))

    # Pure-JAX reference (same math as the PyTorch forward).
    ref = jnp.maximum(x @ w1 + b1, 0.0) @ w2 + b2
    assert out.shape == (batch, output_size)
    assert jnp.allclose(out, ref, atol=1e-5, rtol=1e-5)

    # Exercise the batch grid + ragged-tail padding path (B not a tile multiple).
    xb = jax.random.normal(kx, (300, input_size), jnp.float32)
    outb = jax.block_until_ready(critic_forward(xb, w1, b1, w2, b2, block_b=128))
    refb = jnp.maximum(xb @ w1 + b1, 0.0) @ w2 + b2
    assert outb.shape == (300, output_size)
    assert jnp.allclose(outb, refb, atol=1e-5, rtol=1e-5)

    print("KERNEL_OK")
</pallas_src>

<mosaic_0001>
module attributes {stable_mosaic.version = 11 : i64} {
  func.func @_critic_kernel_vec(%arg0: i32, %arg1: memref<8x4xf32, #tpu.memory_space<vmem>>, %arg2: memref<4x32xf32, #tpu.memory_space<vmem>>, %arg3: memref<1x32xf32, #tpu.memory_space<vmem>>, %arg4: memref<1x32xf32, #tpu.memory_space<vmem>>, %arg5: memref<1x1xf32, #tpu.memory_space<vmem>>, %arg6: memref<8x1xf32, #tpu.memory_space<vmem>>) attributes {dimension_semantics = [#tpu.dimension_semantics<parallel>], iteration_bounds = array<i64: 1>, scalar_prefetch = 0 : i64, scratch_operands = 0 : i64, tpu.core_type = #tpu.core_type<tc>, window_params = [{transform_indices = @transform_0, window_bounds = array<i64: 8, 4>}, {pipeline_mode = #tpu.pipeline_mode<synchronous>, transform_indices = @transform_1, window_bounds = array<i64: 4, 32>}, {pipeline_mode = #tpu.pipeline_mode<synchronous>, transform_indices = @transform_2, window_bounds = array<i64: 1, 32>}, {pipeline_mode = #tpu.pipeline_mode<synchronous>, transform_indices = @transform_3, window_bounds = array<i64: 1, 32>}, {pipeline_mode = #tpu.pipeline_mode<synchronous>, transform_indices = @transform_4, window_bounds = array<i64: 1, 1>}, {transform_indices = @transform_5, window_bounds = array<i64: 8, 1>}]} {
    %c0 = arith.constant 0 : index
    %c0_0 = arith.constant 0 : index
    %0 = vector.load %arg1[%c0, %c0_0] : memref<8x4xf32, #tpu.memory_space<vmem>>, vector<8x4xf32>
    %c0_1 = arith.constant 0 : index
    %c0_2 = arith.constant 0 : index
    %1 = vector.load %arg2[%c0_1, %c0_2] : memref<4x32xf32, #tpu.memory_space<vmem>>, vector<4x32xf32>
    %cst = arith.constant dense<0.000000e+00> : vector<8x32xf32>
    %2 = tpu.matmul %0, %1, %cst {dimension_numbers = #tpu.dot_dimension_numbers<[1], [0], [0], [1], [0, 0, 1, 1], [], []>} : vector<8x4xf32>, vector<4x32xf32>, vector<8x32xf32> -> vector<8x32xf32>
    %c0_3 = arith.constant 0 : index
    %c0_4 = arith.constant 0 : index
    %3 = vector.load %arg3[%c0_3, %c0_4] : memref<1x32xf32, #tpu.memory_space<vmem>>, vector<1x32xf32>
    %4 = vector.broadcast %3 : vector<1x32xf32> to vector<8x32xf32>
    %5 = arith.addf %2, %4 : vector<8x32xf32>
    %cst_5 = arith.constant 0.000000e+00 : f32
    %6 = vector.broadcast %cst_5 : f32 to vector<8x32xf32>
    %7 = arith.maximumf %5, %6 : vector<8x32xf32>
    %c0_6 = arith.constant 0 : index
    %c0_7 = arith.constant 0 : index
    %8 = vector.load %arg4[%c0_6, %c0_7] : memref<1x32xf32, #tpu.memory_space<vmem>>, vector<1x32xf32>
    %9 = vector.broadcast %8 : vector<1x32xf32> to vector<8x32xf32>
    %10 = arith.mulf %7, %9 : vector<8x32xf32>
    %cst_8 = arith.constant dense<0.000000e+00> : vector<8xf32>
    %11 = vector.multi_reduction <add>, %10, %cst_8 [1] : vector<8x32xf32> to vector<8xf32>
    %12 = vector.shape_cast %11 : vector<8xf32> to vector<8x1xf32>
    %c0_9 = arith.constant 0 : index
    %c0_10 = arith.constant 0 : index
    %13 = vector.load %arg5[%c0_9, %c0_10] : memref<1x1xf32, #tpu.memory_space<vmem>>, vector<1x1xf32>
    %14 = vector.broadcast %13 : vector<1x1xf32> to vector<8x1xf32>
    %15 = arith.addf %12, %14 : vector<8x1xf32>
    %c0_11 = arith.constant 0 : index
    %c0_12 = arith.constant 0 : index
    %16 = vector.load %arg6[%c0_11, %c0_12] : memref<8x1xf32, #tpu.memory_space<vmem>>, vector<8x1xf32>
    tpu.vector_store %arg6[%c0_11, %c0_12], %15 {strides = array<i32>} : memref<8x1xf32, #tpu.memory_space<vmem>>, vector<8x1xf32>,
    return
  }
  func.func @transform_0(%arg0: i32) -> (i32, i32) {
    %c0_i32 = arith.constant 0 : i32
    %c0_i32_0 = arith.constant 0 : i32
    return %arg0, %c0_i32 : i32, i32
  }
  func.func @transform_1(%arg0: i32) -> (i32, i32) {
    %c0_i32 = arith.constant 0 : i32
    %c0_i32_0 = arith.constant 0 : i32
    %c0_i32_1 = arith.constant 0 : i32
    return %c0_i32, %c0_i32_0 : i32, i32
  }
  func.func @transform_2(%arg0: i32) -> (i32, i32) {
    %c0_i32 = arith.constant 0 : i32
    %c0_i32_0 = arith.constant 0 : i32
    %c0_i32_1 = arith.constant 0 : i32
    return %c0_i32, %c0_i32_0 : i32, i32
  }
  func.func @transform_3(%arg0: i32) -> (i32, i32) {
    %c0_i32 = arith.constant 0 : i32
    %c0_i32_0 = arith.constant 0 : i32
    %c0_i32_1 = arith.constant 0 : i32
    return %c0_i32, %c0_i32_0 : i32, i32
  }
  func.func @transform_4(%arg0: i32) -> (i32, i32) {
    %c0_i32 = arith.constant 0 : i32
    %c0_i32_0 = arith.constant 0 : i32
    %c0_i32_1 = arith.constant 0 : i32
    return %c0_i32, %c0_i32_0 : i32, i32
  }
  func.func @transform_5(%arg0: i32) -> (i32, i32) {
    %c0_i32 = arith.constant 0 : i32
    %c0_i32_0 = arith.constant 0 : i32
    return %arg0, %c0_i32 : i32, i32
  }
}

</mosaic_0001>

<llo_original>
// kernel: tpu_custom_call.1
$region0: #{tpu_custom_call.1}
  #allocation0 [shape = 'u32[]', space=smem, size = 0x4, offset = 0x4, fixed_abs, tag = 'smem constant byte address 0x4 - core index']
  #allocation1 [shape = 'u32[72,128]{1,0:T(1,128)}', space=vmem, size = 0x9000, scoped, tag = 'internal scratch']
  #allocation2 [shape = 'f32[1,1]{1,0:T(1,128)S(1)}', space=vmem, size = 0x200, scoped, tag = 'scoped memory for tpu_custom_call.1']
  %s0 = inlined_call_operand.vmem [shape: f32[8,4], index: 0, kind: input, shape index: {}]
  %s1 = inlined_call_operand.vmem [shape: f32[4,32], index: 1, kind: input, shape index: {}]
  %s2 = inlined_call_operand.vmem [shape: f32[1,32], index: 2, kind: input, shape index: {}]
  %s3 = inlined_call_operand.vmem [shape: f32[1,32], index: 3, kind: input, shape index: {}]
  %s4 = inlined_call_operand.<no memory space> [shape: f32[1,1], index: 4, kind: input, shape index: {}]
  %s5 = inlined_call_operand.vmem [shape: f32[8,1], index: 5, kind: output, shape index: {}]
  %s6 = sld [smem:[#allocation0]]
  $region30: #{tpu_custom_call.1} parent=0
    _
  %s8 = ssub.s32 1, %s6
  %s9 = scalar_select 0, %s8, %s6
  %v10 = vstv %s4
  %11 = vst [vmem:[#allocation2] sm:$0x1] %v10
  // Predicated region
  $region2: #{tpu_custom_call.1} parent=0 // pred_check
    _
  $region3: #{tpu_custom_call.1} parent=0 // pred_check_branch
    %13 = sbr.rel (0) target = $region5
  $region4: #{tpu_custom_call.1} parent=0 // pred_region
    _
  $region5: #{tpu_custom_call.1} parent=0 // pred_fallthru
    _
  // Predicated region
  $region6: #{tpu_custom_call.1} parent=0 // pred_check
    _
  $region7: #{tpu_custom_call.1} parent=0 // pred_check_branch
    %15 = sbr.rel (0) target = $region9
  $region8: #{tpu_custom_call.1} parent=0 // pred_region
    _
  $region9: #{tpu_custom_call.1} parent=0 // pred_fallthru
    _
  // Predicated region
  $region10: #{tpu_custom_call.1} parent=0 // pred_check
    _
  $region11: #{tpu_custom_call.1} parent=0 // pred_check_branch
    %17 = sbr.rel (0) target = $region13
  $region12: #{tpu_custom_call.1} parent=0 // pred_region
    _
  $region13: #{tpu_custom_call.1} parent=0 // pred_fallthru
    _
  // Predicated region
  $region14: #{tpu_custom_call.1} parent=0 // pred_check
    _
  $region15: #{tpu_custom_call.1} parent=0 // pred_check_branch
    %19 = sbr.rel (0) target = $region17
  $region16: #{tpu_custom_call.1} parent=0 // pred_region
    _
  $region17: #{tpu_custom_call.1} parent=0 // pred_fallthru
    _
  // Predicated region
  $region18: #{tpu_custom_call.1} parent=0 // pred_check
    _
  $region19: #{tpu_custom_call.1} parent=0 // pred_check_branch
    %21 = sbr.rel (0) target = $region21
  $region20: #{tpu_custom_call.1} parent=0 // pred_region
    _
  $region21: #{tpu_custom_call.1} parent=0 // pred_fallthru
    _
  %v22 = vld [vmem:[%s0] sm:$0xff]
  %v23 = vld [vmem:[%s1] sm:$0xf]
  %v24 = vld [vmem:[%s2] sm:$0x1]
  %v26 = vperm.slane %v24, 0
  %vm28 = vcmask 31744
  %v30 = vsel %vm28, %v22, 0
  %vm32 = vcmask 1043456
  %v34 = vsel %vm32, %v23, 0
  %36 = vmatpush.msra.mxu0 0.0
  %37 = vmatpush.msra.mxu0 0.0
  %38 = vmatpush.msra.mxu0 0.0
  %39 = vmatpush.msra.mxu0 0.0
  %40 = vmatpush.msra.mxu0 0.0
  %41 = vmatpush.msra.mxu0 0.0
  %42 = vmatpush.msra.mxu0 0.0
  %43 = vmatpush.msra.mxu0 0.0
  %44 = vmatpush.msra.mxu0 0.0
  %45 = vmatpush.msra.mxu0 0.0
  %46 = vmatpush.msra.mxu0 0.0
  %47 = vmatpush.msra.mxu0 0.0
  %48 = vmatpush.msra.mxu0 0.0
  %49 = vmatpush.msra.mxu0 0.0
  %50 = vmatpush.msra.mxu0 0.0
  %51 = vmatpush.msra.mxu0 %v34
  %52 = vmatmul.f32.gmra.mxu0 %v30
  %v53 = vpop.f32.mrf.mxu0
  %v54 = vadd.f32 %v26, %v53
  %55 = vdwg.mxu0
  %v56 = vmax.f32 %v54, 0.0
  %v57 = vld [vmem:[%s3] sm:$0x1]
  %v59 = vperm.slane %v57, 0
  %v61 = vmul.f32 %v56, %v59
  %vm62 = vcmask 261120
  %v63 = vsel %vm62, %v61, 0.0
  %64 = vadd.xlane.f32.xlu0 %v63
  %v65 = vpop.xlane.xlu0 %64
  %v66 = vld [vmem:[#allocation2] sm:$0x1]
  %v68 = vperm.slane %v66, 0
  %v70 = vadd.f32 %v65, %v68
  %vm71 = vcmask 7168
  %72 = vst.msk [vmem:[%s5] sm:$0xff] %vm71, %v70
  // Predicated region
  $region22: #{tpu_custom_call.1} parent=0 // pred_check
    _
  $region23: #{tpu_custom_call.1} parent=0 // pred_check_branch
    %74 = sbr.rel (0) target = $region25
  $region24: #{tpu_custom_call.1} parent=0 // pred_region
    _
  $region25: #{tpu_custom_call.1} parent=0 // pred_fallthru
    _
  // Predicated region
  $region26: #{tpu_custom_call.1} parent=0 // pred_check
    _
  $region27: #{tpu_custom_call.1} parent=0 // pred_check_branch
    %76 = sbr.rel (0) target = $region29
  $region28: #{tpu_custom_call.1} parent=0 // pred_region
    _
  $region29: #{tpu_custom_call.1} parent=0 // pred_fallthru
    _

</llo_original>
